<compile_context>
chip_gen: v7x
topology: tpu7x:2x2x1
jax: 0.10.0
libtpu: 0.0.40
codegen_flags: <defaults>
</compile_context>

<pallas_src>
import functools

import jax
import jax.numpy as jnp
from jax.experimental import pallas as pl
from jax.experimental.pallas import tpu as pltpu


def _round_up(n, m):
    return ((n + m - 1) // m) * m


def _dsconv_kernel(x_ref, mask_ref, pos_ref, dw_w_ref, dw_b_ref, pw_w_ref,
                   pw_b_ref, out_ref, *, L, K, PAD):
    # x_ref:    (N, C_in)     N = TB * L rows (TB whole sequences, flattened)
    # mask_ref: (N, 1)        sequence mask
    # pos_ref:  (N, 1) int32  position within each sequence (0 .. L-1)
    # dw_w_ref: (K, C_in)     depthwise taps (per-channel), f32
    # dw_b_ref: (1, C_in)     depthwise bias, f32
    # pw_w_ref: (C_in, C_out) pointwise (1x1) weights, bf16
    # pw_b_ref: (1, C_out)    pointwise bias, f32
    # out_ref:  (N, C_out)
    N = x_ref.shape[0]
    x = x_ref[...].astype(jnp.float32)
    pos = pos_ref[...]

    # Depthwise conv: y[r, c] = sum_k x[r + k - PAD, c] * w[k, c] with zero padding
    # at each sequence's edges.  Shifted taps are XLU rotates over the flattened
    # rows; rows whose source position falls outside [0, L) (conv zero-padding or
    # the neighbouring sequence) are zeroed via the position mask.
    y = x * dw_w_ref[PAD:PAD + 1, :]              # centre tap, no shift
    for k in range(K):                            # K is a small static constant
        if k == PAD:
            continue
        s = k - PAD                               # tap offset along the sequence
        tap = pltpu.roll(x, (-s) % N, axis=0)     # tap[r] = x[(r + s) mod N]
        valid = (pos >= -s) & (pos < L - s)       # 0 <= pos + s < L
        y = y + jnp.where(valid, tap, 0.0) * dw_w_ref[k:k + 1, :]
    y = y + dw_b_ref[...]                         # mask applied once, after matmul

    # Pointwise (1x1) conv: one big MXU matmul, bf16 operands, f32 accumulation.
    z = jnp.dot(y.astype(jnp.bfloat16), pw_w_ref[...],
                preferred_element_type=jnp.float32)
    z = (z + pw_b_ref[...]) * mask_ref[...].astype(jnp.float32)
    out_ref[...] = z.astype(out_ref.dtype)


def depthwise_sep_conv(x, x_mask, dw_w, dw_b, pw_w, pw_b, *, kernel_size,
                       rows_per_block=512):
    """x: (B, L, C_in), x_mask: (B, L, 1) -> (B, L, C_out)."""
    B, L, C_in = x.shape
    C_out = pw_w.shape[1]
    K = kernel_size
    if K % 2 != 1:
        raise ValueError("kernel_size must be odd: PyTorch Conv1d with "
                         "padding=(K-1)//2 only preserves length for odd K.")
    PAD = (K - 1) // 2

    LANE = 128
    C_in_p = _round_up(C_in, LANE)
    C_out_p = _round_up(C_out, LANE)

    # Batch tile: enough whole sequences per grid step to give the MXU a large M,
    # clamped so each block stays well inside the (v7x) scoped-VMEM budget.
    TB = max(1, min(B, pl.cdiv(rows_per_block, L)))
    max_rows = max(L, (2 * 1024 * 1024) // (4 * max(C_in_p, C_out_p)))
    TB = max(1, min(TB, max_rows // L))
    if (TB * L) % 8 != 0:          # keep the row block sublane-aligned
        TB = B                     # fall back to a single full-extent block
    B_p = _round_up(B, TB)
    N = B_p * L
    TN = TB * L

    # Wrapper-side zero padding (padded channels / batches have zero weights and
    # zero mask, so they contribute nothing) + flatten (B, L, *) -> (B*L, *) so the
    # kernel blocks are 2-D and lane-dense.
    x2 = jnp.pad(x, ((0, B_p - B), (0, 0), (0, C_in_p - C_in))).reshape(N, C_in_p)
    m2 = jnp.pad(x_mask.astype(jnp.float32),
                 ((0, B_p - B), (0, 0), (0, 0))).reshape(N, 1)
    pos2 = jnp.broadcast_to(jnp.arange(L, dtype=jnp.int32)[None, :],
                            (B_p, L)).reshape(N, 1)
    dw_w_p = jnp.pad(dw_w, ((0, 0), (0, C_in_p - C_in))).astype(jnp.float32)
    dw_b_p = jnp.pad(dw_b, ((0, 0), (0, C_in_p - C_in))).astype(jnp.float32)
    pw_w_p = jnp.pad(pw_w, ((0, C_in_p - C_in),
                            (0, C_out_p - C_out))).astype(jnp.bfloat16)
    pw_b_p = jnp.pad(pw_b, ((0, 0), (0, C_out_p - C_out))).astype(jnp.float32)

    kernel = functools.partial(_dsconv_kernel, L=L, K=K, PAD=PAD)

    out = pl.pallas_call(
        kernel,
        out_shape=jax.ShapeDtypeStruct((N, C_out_p), x.dtype),
        grid=(N // TN,),
        in_specs=[
            pl.BlockSpec((TN, C_in_p), lambda b: (b, 0)),
            pl.BlockSpec((TN, 1), lambda b: (b, 0)),
            pl.BlockSpec((TN, 1), lambda b: (b, 0)),
            pl.BlockSpec((K, C_in_p), lambda b: (0, 0)),
            pl.BlockSpec((1, C_in_p), lambda b: (0, 0)),
            pl.BlockSpec((C_in_p, C_out_p), lambda b: (0, 0)),
            pl.BlockSpec((1, C_out_p), lambda b: (0, 0)),
        ],
        out_specs=pl.BlockSpec((TN, C_out_p), lambda b: (b, 0)),
        compiler_params=pltpu.CompilerParams(
            dimension_semantics=("parallel",)),
    )(x2, m2, pos2, dw_w_p, dw_b_p, pw_w_p, pw_b_p)

    return out.reshape(B_p, L, C_out_p)[:B, :, :C_out]


def ref_forward(x, x_mask, dw_w, dw_b, pw_w, pw_b, *, kernel_size):
    """Pure-JAX reference matching PyTorch semantics (channels-last), with the
    pointwise matmul in bf16 operands / f32 accumulation like the kernel."""
    K = kernel_size
    pad = (K - 1) // 2
    L = x.shape[1]
    xp = jnp.pad(x.astype(jnp.float32), ((0, 0), (pad, pad), (0, 0)))
    y = sum(xp[:, k:k + L, :] * dw_w[k][None, None, :] for k in range(K))
    y = (y + dw_b[0][None, None, :]) * x_mask
    z = jnp.einsum("blc,cd->bld", y.astype(jnp.bfloat16),
                   pw_w.astype(jnp.bfloat16),
                   preferred_element_type=jnp.float32)
    z = (z + pw_b[0][None, None, :]) * x_mask
    return z


if __name__ == "__main__":
    B, L, C_in, C_out, K = 2, 16, 32, 32, 5

    key = jax.random.PRNGKey(0)
    kx, kdw, kdb, kpw, kpb = jax.random.split(key, 5)

    x = jax.random.normal(kx, (B, L, C_in), dtype=jnp.float32)

    # Sequence mask: (B, L, 1), 1.0 on valid positions, 0.0 on padding.
    lengths = jnp.array([L, L - 6])
    pos = jnp.arange(L)
    x_mask = (pos[None, :] < lengths[:, None]).astype(jnp.float32)[..., None]

    # Deterministic PyTorch-style init (uniform(-1/sqrt(fan_in), 1/sqrt(fan_in))).
    dw_bound = 1.0 / (K ** 0.5)          # depthwise: fan_in = (C_in/groups)*K = K
    pw_bound = 1.0 / (C_in ** 0.5)       # pointwise: fan_in = C_in * 1
    dw_w = jax.random.uniform(kdw, (K, C_in), minval=-dw_bound, maxval=dw_bound)
    dw_b = jax.random.uniform(kdb, (1, C_in), minval=-dw_bound, maxval=dw_bound)
    pw_w = jax.random.uniform(kpw, (C_in, C_out), minval=-pw_bound, maxval=pw_bound)
    pw_b = jax.random.uniform(kpb, (1, C_out), minval=-pw_bound, maxval=pw_bound)

    out = depthwise_sep_conv(x, x_mask, dw_w, dw_b, pw_w, pw_b, kernel_size=K)
    out = jax.block_until_ready(out)

    ref = ref_forward(x, x_mask, dw_w, dw_b, pw_w, pw_b, kernel_size=K)
    ref = jax.block_until_ready(ref)

    assert out.shape == (B, L, C_out)
    assert out.dtype == x.dtype
    # Pointwise matmul uses bf16 operands (f32 accumulation) on the MXU in both the
    # kernel and the reference; tolerance covers accumulation-order differences.
    assert jnp.allclose(out, ref, atol=2e-3, rtol=2e-3), float(
        jnp.max(jnp.abs(out - ref)))

    print("KERNEL_OK")
</pallas_src>

<mosaic_0001>
module attributes {stable_mosaic.version = 11 : i64} {
  func.func @_dsconv_kernel(%arg0: i32, %arg1: memref<32x128xf32, #tpu.memory_space<vmem>>, %arg2: memref<32x1xf32, #tpu.memory_space<vmem>>, %arg3: memref<32x1xi32, #tpu.memory_space<vmem>>, %arg4: memref<5x128xf32, #tpu.memory_space<vmem>>, %arg5: memref<1x128xf32, #tpu.memory_space<vmem>>, %arg6: memref<128x128xbf16, #tpu.memory_space<vmem>>, %arg7: memref<1x128xf32, #tpu.memory_space<vmem>>, %arg8: memref<32x128xf32, #tpu.memory_space<vmem>>) attributes {dimension_semantics = [#tpu.dimension_semantics<parallel>], iteration_bounds = array<i64: 1>, scalar_prefetch = 0 : i64, scratch_operands = 0 : i64, tpu.core_type = #tpu.core_type<tc>, window_params = [{transform_indices = @transform_0, window_bounds = array<i64: 32, 128>}, {transform_indices = @transform_1, window_bounds = array<i64: 32, 1>}, {transform_indices = @transform_2, window_bounds = array<i64: 32, 1>}, {pipeline_mode = #tpu.pipeline_mode<synchronous>, transform_indices = @transform_3, window_bounds = array<i64: 5, 128>}, {pipeline_mode = #tpu.pipeline_mode<synchronous>, transform_indices = @transform_4, window_bounds = array<i64: 1, 128>}, {pipeline_mode = #tpu.pipeline_mode<synchronous>, transform_indices = @transform_5, window_bounds = array<i64: 128, 128>}, {pipeline_mode = #tpu.pipeline_mode<synchronous>, transform_indices = @transform_6, window_bounds = array<i64: 1, 128>}, {transform_indices = @transform_7, window_bounds = array<i64: 32, 128>}]} {
    %c0 = arith.constant 0 : index
    %c0_0 = arith.constant 0 : index
    %0 = vector.load %arg1[%c0, %c0_0] : memref<32x128xf32, #tpu.memory_space<vmem>>, vector<32x128xf32>
    %c0_1 = arith.constant 0 : index
    %c0_2 = arith.constant 0 : index
    %1 = vector.load %arg3[%c0_1, %c0_2] : memref<32x1xi32, #tpu.memory_space<vmem>>, vector<32x1xi32>
    %c2 = arith.constant 2 : index
    %c0_3 = arith.constant 0 : index
    %2 = vector.load %arg4[%c2, %c0_3] : memref<5x128xf32, #tpu.memory_space<vmem>>, vector<1x128xf32>
    %3 = vector.broadcast %2 : vector<1x128xf32> to vector<32x128xf32>
    %4 = arith.mulf %0, %3 : vector<32x128xf32>
    %c2_i32 = arith.constant 2 : i32
    %5 = tpu.dynamic_rotate %0 by %c2_i32 dim 0 : vector<32x128xf32>, i32 -> vector<32x128xf32>
    %c2_i32_4 = arith.constant 2 : i32
    %6 = vector.broadcast %c2_i32_4 : i32 to vector<32x1xi32>
    %7 = arith.cmpi sge, %1, %6 : vector<32x1xi32>
    %c18_i32 = arith.constant 18 : i32
    %8 = vector.broadcast %c18_i32 : i32 to vector<32x1xi32>
    %9 = arith.cmpi slt, %1, %8 : vector<32x1xi32>
    %10 = arith.andi %7, %9 : vector<32x1xi1>
    %cst = arith.constant 0.000000e+00 : f32
    %11 = vector.shape_cast %10 : vector<32x1xi1> to vector<32x1xi1>
    %12 = vector.broadcast %11 : vector<32x1xi1> to vector<32x128xi1>
    %13 = vector.broadcast %cst : f32 to vector<32x128xf32>
    %14 = arith.select %12, %5, %13 : vector<32x128xi1>, vector<32x128xf32>
    %c0_5 = arith.constant 0 : index
    %c0_6 = arith.constant 0 : index
    %15 = vector.load %arg4[%c0_5, %c0_6] : memref<5x128xf32, #tpu.memory_space<vmem>>, vector<1x128xf32>
    %16 = vector.broadcast %15 : vector<1x128xf32> to vector<32x128xf32>
    %17 = arith.mulf %14, %16 : vector<32x128xf32>
    %18 = arith.addf %4, %17 : vector<32x128xf32>
    %c1_i32 = arith.constant 1 : i32
    %19 = tpu.dynamic_rotate %0 by %c1_i32 dim 0 : vector<32x128xf32>, i32 -> vector<32x128xf32>
    %c1_i32_7 = arith.constant 1 : i32
    %20 = vector.broadcast %c1_i32_7 : i32 to vector<32x1xi32>
    %21 = arith.cmpi sge, %1, %20 : vector<32x1xi32>
    %c17_i32 = arith.constant 17 : i32
    %22 = vector.broadcast %c17_i32 : i32 to vector<32x1xi32>
    %23 = arith.cmpi slt, %1, %22 : vector<32x1xi32>
    %24 = arith.andi %21, %23 : vector<32x1xi1>
    %cst_8 = arith.constant 0.000000e+00 : f32
    %25 = vector.shape_cast %24 : vector<32x1xi1> to vector<32x1xi1>
    %26 = vector.broadcast %25 : vector<32x1xi1> to vector<32x128xi1>
    %27 = vector.broadcast %cst_8 : f32 to vector<32x128xf32>
    %28 = arith.select %26, %19, %27 : vector<32x128xi1>, vector<32x128xf32>
    %c1 = arith.constant 1 : index
    %c0_9 = arith.constant 0 : index
    %29 = vector.load %arg4[%c1, %c0_9] : memref<5x128xf32, #tpu.memory_space<vmem>>, vector<1x128xf32>
    %30 = vector.broadcast %29 : vector<1x128xf32> to vector<32x128xf32>
    %31 = arith.mulf %28, %30 : vector<32x128xf32>
    %32 = arith.addf %18, %31 : vector<32x128xf32>
    %c31_i32 = arith.constant 31 : i32
    %33 = tpu.dynamic_rotate %0 by %c31_i32 dim 0 : vector<32x128xf32>, i32 -> vector<32x128xf32>
    %c-1_i32 = arith.constant -1 : i32
    %34 = vector.broadcast %c-1_i32 : i32 to vector<32x1xi32>
    %35 = arith.cmpi sge, %1, %34 : vector<32x1xi32>
    %c15_i32 = arith.constant 15 : i32
    %36 = vector.broadcast %c15_i32 : i32 to vector<32x1xi32>
    %37 = arith.cmpi slt, %1, %36 : vector<32x1xi32>
    %38 = arith.andi %35, %37 : vector<32x1xi1>
    %cst_10 = arith.constant 0.000000e+00 : f32
    %39 = vector.shape_cast %38 : vector<32x1xi1> to vector<32x1xi1>
    %40 = vector.broadcast %39 : vector<32x1xi1> to vector<32x128xi1>
    %41 = vector.broadcast %cst_10 : f32 to vector<32x128xf32>
    %42 = arith.select %40, %33, %41 : vector<32x128xi1>, vector<32x128xf32>
    %c3 = arith.constant 3 : index
    %c0_11 = arith.constant 0 : index
    %43 = vector.load %arg4[%c3, %c0_11] : memref<5x128xf32, #tpu.memory_space<vmem>>, vector<1x128xf32>
    %44 = vector.broadcast %43 : vector<1x128xf32> to vector<32x128xf32>
    %45 = arith.mulf %42, %44 : vector<32x128xf32>
    %46 = arith.addf %32, %45 : vector<32x128xf32>
    %c30_i32 = arith.constant 30 : i32
    %47 = tpu.dynamic_rotate %0 by %c30_i32 dim 0 : vector<32x128xf32>, i32 -> vector<32x128xf32>
    %c-2_i32 = arith.constant -2 : i32
    %48 = vector.broadcast %c-2_i32 : i32 to vector<32x1xi32>
    %49 = arith.cmpi sge, %1, %48 : vector<32x1xi32>
    %c14_i32 = arith.constant 14 : i32
    %50 = vector.broadcast %c14_i32 : i32 to vector<32x1xi32>
    %51 = arith.cmpi slt, %1, %50 : vector<32x1xi32>
    %52 = arith.andi %49, %51 : vector<32x1xi1>
    %cst_12 = arith.constant 0.000000e+00 : f32
    %53 = vector.shape_cast %52 : vector<32x1xi1> to vector<32x1xi1>
    %54 = vector.broadcast %53 : vector<32x1xi1> to vector<32x128xi1>
    %55 = vector.broadcast %cst_12 : f32 to vector<32x128xf32>
    %56 = arith.select %54, %47, %55 : vector<32x128xi1>, vector<32x128xf32>
    %c4 = arith.constant 4 : index
    %c0_13 = arith.constant 0 : index
    %57 = vector.load %arg4[%c4, %c0_13] : memref<5x128xf32, #tpu.memory_space<vmem>>, vector<1x128xf32>
    %58 = vector.broadcast %57 : vector<1x128xf32> to vector<32x128xf32>
    %59 = arith.mulf %56, %58 : vector<32x128xf32>
    %60 = arith.addf %46, %59 : vector<32x128xf32>
    %c0_14 = arith.constant 0 : index
    %c0_15 = arith.constant 0 : index
    %61 = vector.load %arg5[%c0_14, %c0_15] : memref<1x128xf32, #tpu.memory_space<vmem>>, vector<1x128xf32>
    %62 = vector.broadcast %61 : vector<1x128xf32> to vector<32x128xf32>
    %63 = arith.addf %60, %62 : vector<32x128xf32>
    %64 = arith.truncf %63 : vector<32x128xf32> to vector<32x128xbf16>
    %c0_16 = arith.constant 0 : index
    %c0_17 = arith.constant 0 : index
    %65 = vector.load %arg6[%c0_16, %c0_17] : memref<128x128xbf16, #tpu.memory_space<vmem>>, vector<128x128xbf16>
    %cst_18 = arith.constant dense<0.000000e+00> : vector<32x128xf32>
    %66 = tpu.matmul %64, %65, %cst_18 {dimension_numbers = #tpu.dot_dimension_numbers<[1], [0], [0], [1], [0, 0, 1, 1], [], []>} : vector<32x128xbf16>, vector<128x128xbf16>, vector<32x128xf32> -> vector<32x128xf32>
    %c0_19 = arith.constant 0 : index
    %c0_20 = arith.constant 0 : index
    %67 = vector.load %arg7[%c0_19, %c0_20] : memref<1x128xf32, #tpu.memory_space<vmem>>, vector<1x128xf32>
    %68 = vector.broadcast %67 : vector<1x128xf32> to vector<32x128xf32>
    %69 = arith.addf %66, %68 : vector<32x128xf32>
    %c0_21 = arith.constant 0 : index
    %c0_22 = arith.constant 0 : index
    %70 = vector.load %arg2[%c0_21, %c0_22] : memref<32x1xf32, #tpu.memory_space<vmem>>, vector<32x1xf32>
    %71 = vector.broadcast %70 : vector<32x1xf32> to vector<32x128xf32>
    %72 = arith.mulf %69, %71 : vector<32x128xf32>
    %c0_23 = arith.constant 0 : index
    %c0_24 = arith.constant 0 : index
    %73 = vector.load %arg8[%c0_23, %c0_24] : memref<32x128xf32, #tpu.memory_space<vmem>>, vector<32x128xf32>
    tpu.vector_store %arg8[%c0_23, %c0_24], %72 {strides = array<i32>} : memref<32x128xf32, #tpu.memory_space<vmem>>, vector<32x128xf32>,
    return
  }
  func.func @transform_0(%arg0: i32) -> (i32, i32) {
    %c0_i32 = arith.constant 0 : i32
    %c0_i32_0 = arith.constant 0 : i32
    return %arg0, %c0_i32 : i32, i32
  }
  func.func @transform_1(%arg0: i32) -> (i32, i32) {
    %c0_i32 = arith.constant 0 : i32
    %c0_i32_0 = arith.constant 0 : i32
    return %arg0, %c0_i32 : i32, i32
  }
  func.func @transform_2(%arg0: i32) -> (i32, i32) {
    %c0_i32 = arith.constant 0 : i32
    %c0_i32_0 = arith.constant 0 : i32
    return %arg0, %c0_i32 : i32, i32
  }
  func.func @transform_3(%arg0: i32) -> (i32, i32) {
    %c0_i32 = arith.constant 0 : i32
    %c0_i32_0 = arith.constant 0 : i32
    %c0_i32_1 = arith.constant 0 : i32
    return %c0_i32, %c0_i32_0 : i32, i32
  }
  func.func @transform_4(%arg0: i32) -> (i32, i32) {
    %c0_i32 = arith.constant 0 : i32
    %c0_i32_0 = arith.constant 0 : i32
    %c0_i32_1 = arith.constant 0 : i32
    return %c0_i32, %c0_i32_0 : i32, i32
  }
  func.func @transform_5(%arg0: i32) -> (i32, i32) {
    %c0_i32 = arith.constant 0 : i32
    %c0_i32_0 = arith.constant 0 : i32
    %c0_i32_1 = arith.constant 0 : i32
    return %c0_i32, %c0_i32_0 : i32, i32
  }
  func.func @transform_6(%arg0: i32) -> (i32, i32) {
    %c0_i32 = arith.constant 0 : i32
    %c0_i32_0 = arith.constant 0 : i32
    %c0_i32_1 = arith.constant 0 : i32
    return %c0_i32, %c0_i32_0 : i32, i32
  }
  func.func @transform_7(%arg0: i32) -> (i32, i32) {
    %c0_i32 = arith.constant 0 : i32
    %c0_i32_0 = arith.constant 0 : i32
    return %arg0, %c0_i32 : i32, i32
  }
}

</mosaic_0001>

<llo_original>
// kernel: tpu_custom_call.1
$region0: #{tpu_custom_call.1}
  #allocation0 [shape = 'u32[]', space=smem, size = 0x4, offset = 0x4, fixed_abs, tag = 'smem constant byte address 0x4 - core index']
  #allocation1 [shape = 'u32[144,128]{1,0:T(1,128)}', space=vmem, size = 0x12000, scoped, tag = 'internal scratch']
  %s0 = inlined_call_operand.hbm [shape: f32[32,128], index: 0, kind: input, shape index: {}]
  %s1 = inlined_call_operand.vmem [shape: f32[32,1], index: 1, kind: input, shape index: {}]
  %s2 = inlined_call_operand.vmem [shape: s32[32,1], index: 2, kind: input, shape index: {}]
  %s3 = inlined_call_operand.vmem [shape: f32[5,128], index: 3, kind: input, shape index: {}]
  %s4 = inlined_call_operand.vmem [shape: f32[1,128], index: 4, kind: input, shape index: {}]
  %s5 = inlined_call_operand.vmem [shape: bf16[128,128], index: 5, kind: input, shape index: {}]
  %s6 = inlined_call_operand.vmem [shape: f32[1,128], index: 6, kind: input, shape index: {}]
  %s7 = inlined_call_operand.hbm [shape: f32[32,128], index: 7, kind: output, shape index: {}]
  %s8 = sld [smem:[#allocation0]]
  $region42: #{tpu_custom_call.1} parent=0
    _
  %s10 = ssub.s32 1, %s8
  %s11 = scalar_select 0, %s10, %s8
  $region1: #{tpu_custom_call.1} parent=0
    #allocation2 [shape = 'u8[16384]{0}', space=vmem, size = 0x4000, scoped, tag = 'input window, operand 0, single buffered']
    #allocation3 [shape = 's32[1]{0}', space=sflag, size = 0x4, scoped, tag = 'scoped memory for tpu_custom_call.1']
    #allocation4 [shape = 's32[1]{0}', space=sflag, size = 0x4, scoped, tag = 'scoped memory for tpu_custom_call.1']
    #allocation5 [shape = 'u8[16384]{0}', space=vmem, size = 0x4000, scoped, tag = 'output window, operand 0, single buffered']
    %12 = vsyncpa [#allocation3], 0
    %13 = vsyncpa [#allocation4], 0
    // Predicated region
    $region2: #{tpu_custom_call.1} parent=1 // pred_check
      _
    $region3: #{tpu_custom_call.1} parent=1 // pred_check_branch
      %15 = sbr.rel (0) target = $region5
    $region4: #{tpu_custom_call.1} parent=1 // pred_region
      %s17 = ssub.s32 512, 512
      %18 = vsyncadd [#allocation3], %s17
      %s19 = sshll.u32 [#allocation2], 4
      %s20 = int_to_ptr.vmem [resolvable:$true] %s19
      %25 = dma.hbm_to_vmem [thread:$0]  %s0, 512, %s20, [#allocation3], 128, 128, 8
    $region5: #{tpu_custom_call.1} parent=1 // pred_fallthru
      _
    // Predicated region
    $region6: #{tpu_custom_call.1} parent=1 // pred_check
      _
    $region7: #{tpu_custom_call.1} parent=1 // pred_check_branch
      %27 = sbr.rel (0) target = $region9
    $region8: #{tpu_custom_call.1} parent=1 // pred_region
      _
    $region9: #{tpu_custom_call.1} parent=1 // pred_fallthru
      _
    // Predicated region
    $region10: #{tpu_custom_call.1} parent=1 // pred_check
      _
    $region11: #{tpu_custom_call.1} parent=1 // pred_check_branch
      %29 = sbr.rel (0) target = $region13
    $region12: #{tpu_custom_call.1} parent=1 // pred_region
      _
    $region13: #{tpu_custom_call.1} parent=1 // pred_fallthru
      _
    // Predicated region
    $region14: #{tpu_custom_call.1} parent=1 // pred_check
      _
    $region15: #{tpu_custom_call.1} parent=1 // pred_check_branch
      %31 = sbr.rel (0) target = $region17
    $region16: #{tpu_custom_call.1} parent=1 // pred_region
      _
    $region17: #{tpu_custom_call.1} parent=1 // pred_fallthru
      _
    // Predicated region
    $region18: #{tpu_custom_call.1} parent=1 // pred_check
      _
    $region19: #{tpu_custom_call.1} parent=1 // pred_check_branch
      %33 = sbr.rel (0) target = $region21
    $region20: #{tpu_custom_call.1} parent=1 // pred_region
      _
    $region21: #{tpu_custom_call.1} parent=1 // pred_fallthru
      _
    // Predicated region
    $region22: #{tpu_custom_call.1} parent=1 // pred_check
      _
    $region23: #{tpu_custom_call.1} parent=1 // pred_check_branch
      %35 = sbr.rel (0) target = $region25
    $region24: #{tpu_custom_call.1} parent=1 // pred_region
      _
    $region25: #{tpu_custom_call.1} parent=1 // pred_fallthru
      _
    // Predicated region
    $region26: #{tpu_custom_call.1} parent=1 // pred_check
      _
    $region27: #{tpu_custom_call.1} parent=1 // pred_check_branch
      %37 = sbr.rel (0) target = $region29
    $region28: #{tpu_custom_call.1} parent=1 // pred_region
      _
    $region29: #{tpu_custom_call.1} parent=1 // pred_fallthru
      _
    // Predicated region
    $region30: #{tpu_custom_call.1} parent=1 // pred_check
      _
    $region31: #{tpu_custom_call.1} parent=1 // pred_check_branch
      %39 = sbr.rel (0) target = $region33
    $region32: #{tpu_custom_call.1} parent=1 // pred_region
      %40 = dma.done [#allocation3], 512
    $region33: #{tpu_custom_call.1} parent=1 // pred_fallthru
      _
    %v42 = vld [vmem:[#allocation2] sm:$0xff]
    %v43 = vld [vmem:[#allocation2 + $0x8] sm:$0xff]
    %v44 = vld [vmem:[#allocation2 + $0x10] sm:$0xff]
    %v45 = vld [vmem:[#allocation2 + $0x18] sm:$0xff]
    %v46 = vld [vmem:[%s2] sm:$0xff]
    %v47 = vld [vmem:[%s2 + $0x8] sm:$0xff]
    %v48 = vld [vmem:[%s2 + $0x10] sm:$0xff]
    %v49 = vld [vmem:[%s2 + $0x18] sm:$0xff]
    %v50 = vld [vmem:[%s3 + $0x2] sm:$0x1]
    %v51 = vlaneseq
    %v52 = vshrl.u32 %v51, 7
    %v53 = vsub.s32 0, %v52
    %v54 = vrot.slane %v50, %v53
    %v55 = vmul.f32 %v42, %v54
    %v56 = vmul.f32 %v43, %v54
    %v57 = vmul.f32 %v44, %v54
    %v58 = vmul.f32 %v45, %v54
    %v59 = vrot.slane %v42, 6
    %v60 = vrot.slane %v43, 6
    %v61 = vrot.slane %v44, 6
    %v62 = vrot.slane %v45, 6
    %v63 = vlaneseq
    %v64 = vshrl.u32 %v63, 7
    %vm65 = vcmp.lt.s32.totalorder %v64, 2
    %v66 = vsel %vm65, %v61, %v62
    %v67 = vsel %vm65, %v60, %v61
    %v68 = vsel %vm65, %v59, %v60
    %v69 = vsel %vm65, %v62, %v59
    %vm70 = vcmp.ge.s32.totalorder %v46, 2
    %vm71 = vcmp.ge.s32.totalorder %v47, 2
    %vm72 = vcmp.ge.s32.totalorder %v48, 2
    %vm73 = vcmp.ge.s32.totalorder %v49, 2
    %vm74 = vcmp.lt.s32.totalorder %v46, 18
    %vm75 = vcmp.lt.s32.totalorder %v47, 18
    %vm76 = vcmp.lt.s32.totalorder %v48, 18
    %vm77 = vcmp.lt.s32.totalorder %v49, 18
    %vm78 = vmand %vm70, %vm74
    %vm79 = vmand %vm71, %vm75
    %vm80 = vmand %vm72, %vm76
    %vm81 = vmand %vm73, %vm77
    %v82 = vsel %vm78, 1, 0
    %v83 = vsel %vm79, 1, 0
    %v84 = vsel %vm80, 1, 0
    %v85 = vsel %vm81, 1, 0
    %86 = vset.pattern.permute.xlu0 0
    %87 = vperm.xlu0 %86, %v82
    %v88 = vpop.permute.xlu0 %87
    %89 = vset.pattern.permute.xlu0 0
    %90 = vperm.xlu0 %89, %v83
    %v91 = vpop.permute.xlu0 %90
    %92 = vset.pattern.permute.xlu0 0
    %93 = vperm.xlu0 %92, %v84
    %v94 = vpop.permute.xlu0 %93
    %95 = vset.pattern.permute.xlu0 0
    %96 = vperm.xlu0 %95, %v85
    %v97 = vpop.permute.xlu0 %96
    %vm98 = vcmp.eq.s32.totalorder %v88, 1
    %vm99 = vcmp.eq.s32.totalorder %v91, 1
    %vm100 = vcmp.eq.s32.totalorder %v94, 1
    %vm101 = vcmp.eq.s32.totalorder %v97, 1
    %v102 = vsel %vm98, %v69, 0.0
    %v103 = vsel %vm99, %v68, 0.0
    %v104 = vsel %vm100, %v67, 0.0
    %v105 = vsel %vm101, %v66, 0.0
    %v106 = vld [vmem:[%s3] sm:$0x1]
    %v107 = vlaneseq
    %v108 = vshrl.u32 %v107, 7
    %v109 = vsub.s32 0, %v108
    %v110 = vrot.slane %v106, %v109
    %v111 = vmul.f32 %v102, %v110
    %v112 = vmul.f32 %v103, %v110
    %v113 = vmul.f32 %v104, %v110
    %v114 = vmul.f32 %v105, %v110
    %v115 = vadd.f32 %v55, %v111
    %v116 = vadd.f32 %v56, %v112
    %v117 = vadd.f32 %v57, %v113
    %v118 = vadd.f32 %v58, %v114
    %v119 = vrot.slane %v42, 7
    %v120 = vrot.slane %v43, 7
    %v121 = vrot.slane %v44, 7
    %v122 = vrot.slane %v45, 7
    %vm123 = vcmp.lt.s32.totalorder %v64, 1
    %v124 = vsel %vm123, %v121, %v122
    %v125 = vsel %vm123, %v120, %v121
    %v126 = vsel %vm123, %v119, %v120
    %v127 = vsel %vm123, %v122, %v119
    %vm128 = vcmp.ge.s32.totalorder %v46, 1
    %vm129 = vcmp.ge.s32.totalorder %v47, 1
    %vm130 = vcmp.ge.s32.totalorder %v48, 1
    %vm131 = vcmp.ge.s32.totalorder %v49, 1
    %vm132 = vcmp.lt.s32.totalorder %v46, 17
    %vm133 = vcmp.lt.s32.totalorder %v47, 17
    %vm134 = vcmp.lt.s32.totalorder %v48, 17
    %vm135 = vcmp.lt.s32.totalorder %v49, 17
    %vm136 = vmand %vm128, %vm132
    %vm137 = vmand %vm129, %vm133
    %vm138 = vmand %vm130, %vm134
    %vm139 = vmand %vm131, %vm135
    %v140 = vsel %vm136, 1, 0
    %v141 = vsel %vm137, 1, 0
    %v142 = vsel %vm138, 1, 0
    %v143 = vsel %vm139, 1, 0
    %144 = vset.pattern.permute.xlu0 0
    %145 = vperm.xlu0 %144, %v140
    %v146 = vpop.permute.xlu0 %145
    %147 = vset.pattern.permute.xlu0 0
    %148 = vperm.xlu0 %147, %v141
    %v149 = vpop.permute.xlu0 %148
    %150 = vset.pattern.permute.xlu0 0
    %151 = vperm.xlu0 %150, %v142
    %v152 = vpop.permute.xlu0 %151
    %153 = vset.pattern.permute.xlu0 0
    %154 = vperm.xlu0 %153, %v143
    %v155 = vpop.permute.xlu0 %154
    %vm156 = vcmp.eq.s32.totalorder %v146, 1
    %vm157 = vcmp.eq.s32.totalorder %v149, 1
    %vm158 = vcmp.eq.s32.totalorder %v152, 1
    %vm159 = vcmp.eq.s32.totalorder %v155, 1
    %v160 = vsel %vm156, %v127, 0.0
    %v161 = vsel %vm157, %v126, 0.0
    %v162 = vsel %vm158, %v125, 0.0
    %v163 = vsel %vm159, %v124, 0.0
    %v164 = vld [vmem:[%s3 + $0x1] sm:$0x1]
    %v165 = vlaneseq
    %v166 = vshrl.u32 %v165, 7
    %v167 = vsub.s32 0, %v166
    %v168 = vrot.slane %v164, %v167
    %v169 = vmul.f32 %v160, %v168
    %v170 = vmul.f32 %v161, %v168
    %v171 = vmul.f32 %v162, %v168
    %v172 = vmul.f32 %v163, %v168
    %v173 = vadd.f32 %v115, %v169
    %v174 = vadd.f32 %v116, %v170
    %v175 = vadd.f32 %v117, %v171
    %v176 = vadd.f32 %v118, %v172
    %v177 = vrot.slane %v42, 1
    %v178 = vrot.slane %v43, 1
    %v179 = vrot.slane %v44, 1
    %v180 = vrot.slane %v45, 1
    %vm181 = vcmp.lt.s32.totalorder %v64, 7
    %v182 = vsel %vm181, %v179, %v180
    %v183 = vsel %vm181, %v178, %v179
    %v184 = vsel %vm181, %v177, %v178
    %v185 = vsel %vm181, %v180, %v177
    %vm186 = vcmp.ge.s32.totalorder %v46, 4294967295
    %vm187 = vcmp.ge.s32.totalorder %v47, 4294967295
    %vm188 = vcmp.ge.s32.totalorder %v48, 4294967295
    %vm189 = vcmp.ge.s32.totalorder %v49, 4294967295
    %vm190 = vcmp.lt.s32.totalorder %v46, 15
    %vm191 = vcmp.lt.s32.totalorder %v47, 15
    %vm192 = vcmp.lt.s32.totalorder %v48, 15
    %vm193 = vcmp.lt.s32.totalorder %v49, 15
    %vm194 = vmand %vm186, %vm190
    %vm195 = vmand %vm187, %vm191
    %vm196 = vmand %vm188, %vm192
    %vm197 = vmand %vm189, %vm193
    %v198 = vsel %vm194, 1, 0
    %v199 = vsel %vm195, 1, 0
    %v200 = vsel %vm196, 1, 0
    %v201 = vsel %vm197, 1, 0
    %202 = vset.pattern.permute.xlu0 0
    %203 = vperm.xlu0 %202, %v198
    %v204 = vpop.permute.xlu0 %203
    %205 = vset.pattern.permute.xlu0 0
    %206 = vperm.xlu0 %205, %v199
    %v207 = vpop.permute.xlu0 %206
    %208 = vset.pattern.permute.xlu0 0
    %209 = vperm.xlu0 %208, %v200
    %v210 = vpop.permute.xlu0 %209
    %211 = vset.pattern.permute.xlu0 0
    %212 = vperm.xlu0 %211, %v201
    %v213 = vpop.permute.xlu0 %212
    %vm214 = vcmp.eq.s32.totalorder %v204, 1
    %vm215 = vcmp.eq.s32.totalorder %v207, 1
    %vm216 = vcmp.eq.s32.totalorder %v210, 1
    %vm217 = vcmp.eq.s32.totalorder %v213, 1
    %v218 = vsel %vm214, %v184, 0.0
    %v219 = vsel %vm215, %v183, 0.0
    %v220 = vsel %vm216, %v182, 0.0
    %v221 = vsel %vm217, %v185, 0.0
    %v222 = vld [vmem:[%s3 + $0x3] sm:$0x1]
    %v223 = vlaneseq
    %v224 = vshrl.u32 %v223, 7
    %v225 = vsub.s32 0, %v224
    %v226 = vrot.slane %v222, %v225
    %v227 = vmul.f32 %v218, %v226
    %v228 = vmul.f32 %v219, %v226
    %v229 = vmul.f32 %v220, %v226
    %v230 = vmul.f32 %v221, %v226
    %v231 = vadd.f32 %v173, %v227
    %v232 = vadd.f32 %v174, %v228
    %v233 = vadd.f32 %v175, %v229
    %v234 = vadd.f32 %v176, %v230
    %v235 = vrot.slane %v42, 2
    %v236 = vrot.slane %v43, 2
    %v237 = vrot.slane %v44, 2
    %v238 = vrot.slane %v45, 2
    %vm239 = vcmp.lt.s32.totalorder %v64, 6
    %v240 = vsel %vm239, %v237, %v238
    %v241 = vsel %vm239, %v236, %v237
    %v242 = vsel %vm239, %v235, %v236
    %v243 = vsel %vm239, %v238, %v235
    %vm244 = vcmp.ge.s32.totalorder %v46, 4294967294
    %vm245 = vcmp.ge.s32.totalorder %v47, 4294967294
    %vm246 = vcmp.ge.s32.totalorder %v48, 4294967294
    %vm247 = vcmp.ge.s32.totalorder %v49, 4294967294
    %vm248 = vcmp.lt.s32.totalorder %v46, 14
    %vm249 = vcmp.lt.s32.totalorder %v47, 14
    %vm250 = vcmp.lt.s32.totalorder %v48, 14
    %vm251 = vcmp.lt.s32.totalorder %v49, 14
    %vm252 = vmand %vm244, %vm248
    %vm253 = vmand %vm245, %vm249
    %vm254 = vmand %vm246, %vm250
    %vm255 = vmand %vm247, %vm251
    %v256 = vsel %vm252, 1, 0
    %v257 = vsel %vm253, 1, 0
    %v258 = vsel %vm254, 1, 0
    %v259 = vsel %vm255, 1, 0
    %260 = vset.pattern.permute.xlu0 0
    %261 = vperm.xlu0 %260, %v256
    %v262 = vpop.permute.xlu0 %261
    %263 = vset.pattern.permute.xlu0 0
    %264 = vperm.xlu0 %263, %v257
    %v265 = vpop.permute.xlu0 %264
    %266 = vset.pattern.permute.xlu0 0
    %267 = vperm.xlu0 %266, %v258
    %v268 = vpop.permute.xlu0 %267
    %269 = vset.pattern.permute.xlu0 0
    %270 = vperm.xlu0 %269, %v259
    %v271 = vpop.permute.xlu0 %270
    %vm272 = vcmp.eq.s32.totalorder %v262, 1
    %vm273 = vcmp.eq.s32.totalorder %v265, 1
    %vm274 = vcmp.eq.s32.totalorder %v268, 1
    %vm275 = vcmp.eq.s32.totalorder %v271, 1
    %v276 = vsel %vm272, %v242, 0.0
    %v277 = vsel %vm273, %v241, 0.0
    %v278 = vsel %vm274, %v240, 0.0
    %v279 = vsel %vm275, %v243, 0.0
    %v280 = vld [vmem:[%s3 + $0x4] sm:$0x1]
    %v281 = vlaneseq
    %v282 = vshrl.u32 %v281, 7
    %v283 = vsub.s32 0, %v282
    %v284 = vrot.slane %v280, %v283
    %v285 = vmul.f32 %v276, %v284
    %v286 = vmul.f32 %v277, %v284
    %v287 = vmul.f32 %v278, %v284
    %v288 = vmul.f32 %v279, %v284
    %v289 = vadd.f32 %v231, %v285
    %v290 = vadd.f32 %v232, %v286
    %v291 = vadd.f32 %v233, %v287
    %v292 = vadd.f32 %v234, %v288
    %v293 = vld [vmem:[%s4] sm:$0x1]
    %v295 = vlaneseq
    %v296 = vshrl.u32 %v295, 7
    %v297 = vsub.s32 0, %v296
    %v298 = vrot.slane %v293, %v297
    %v300 = vadd.f32 %v289, %v298
    %v301 = vadd.f32 %v290, %v298
    %v302 = vadd.f32 %v291, %v298
    %v303 = vadd.f32 %v292, %v298
    %v304 = vpack.c.bf16 %v301, %v300
    %v305 = vpack.c.bf16 %v303, %v302
    %v306 = vld [vmem:[%s5] sm:$0xf]
    %v307 = vld [vmem:[%s5 + $0x4] sm:$0xf]
    %v308 = vld [vmem:[%s5 + $0x8] sm:$0xf]
    %v309 = vld [vmem:[%s5 + $0xc] sm:$0xf]
    %v310 = vld [vmem:[%s5 + $0x10] sm:$0xf]
    %v311 = vld [vmem:[%s5 + $0x14] sm:$0xf]
    %v312 = vld [vmem:[%s5 + $0x18] sm:$0xf]
    %v313 = vld [vmem:[%s5 + $0x1c] sm:$0xf]
    %v314 = vld [vmem:[%s5 + $0x20] sm:$0xf]
    %v315 = vld [vmem:[%s5 + $0x24] sm:$0xf]
    %v316 = vld [vmem:[%s5 + $0x28] sm:$0xf]
    %v317 = vld [vmem:[%s5 + $0x2c] sm:$0xf]
    %v318 = vld [vmem:[%s5 + $0x30] sm:$0xf]
    %v319 = vld [vmem:[%s5 + $0x34] sm:$0xf]
    %v320 = vld [vmem:[%s5 + $0x38] sm:$0xf]
    %v321 = vld [vmem:[%s5 + $0x3c] sm:$0xf]
    %v322 = vld [vmem:[%s6] sm:$0x1]
    %v324 = vlaneseq
    %v325 = vshrl.u32 %v324, 7
    %v326 = vsub.s32 0, %v325
    %v327 = vrot.slane %v322, %v326
    %v345 = vunpack.c.l.b16 %v306
    %v346 = vunpack.c.l.b16 %v307
    %v347 = vunpack.c.l.b16 %v308
    %v348 = vunpack.c.l.b16 %v309
    %v349 = vunpack.c.l.b16 %v310
    %v350 = vunpack.c.l.b16 %v311
    %v351 = vunpack.c.l.b16 %v312
    %v352 = vunpack.c.l.b16 %v313
    %v353 = vunpack.c.l.b16 %v314
    %v354 = vunpack.c.l.b16 %v315
    %v355 = vunpack.c.l.b16 %v316
    %v356 = vunpack.c.l.b16 %v317
    %v357 = vunpack.c.l.b16 %v318
    %v358 = vunpack.c.l.b16 %v319
    %v359 = vunpack.c.l.b16 %v320
    %v360 = vunpack.c.l.b16 %v321
    %v361 = vpack.c.b16 %v346, %v345
    %v362 = vpack.c.b16 %v348, %v347
    %v363 = vpack.c.b16 %v350, %v349
    %v364 = vpack.c.b16 %v352, %v351
    %v365 = vpack.c.b16 %v354, %v353
    %v366 = vpack.c.b16 %v356, %v355
    %v367 = vpack.c.b16 %v358, %v357
    %v368 = vpack.c.b16 %v360, %v359
    %377 = vmatprep.subr.bf16.mxu0 0
    %378 = vmatpush1.bf16.msra.mxu0 %v361
    %379 = vmatprep.subr.bf16.mxu0 0
    %380 = vmatpush1.bf16.msra.mxu0 %v362
    %381 = vmatprep.subr.bf16.mxu0 0
    %382 = vmatpush1.bf16.msra.mxu0 %v363
    %383 = vmatprep.subr.bf16.mxu0 0
    %384 = vmatpush1.bf16.msra.mxu0 %v364
    %385 = vmatprep.subr.bf16.mxu0 0
    %386 = vmatpush1.bf16.msra.mxu0 %v365
    %387 = vmatprep.subr.bf16.mxu0 0
    %388 = vmatpush1.bf16.msra.mxu0 %v366
    %389 = vmatprep.subr.bf16.mxu0 0
    %390 = vmatpush1.bf16.msra.mxu0 %v367
    %391 = vmatprep.subr.bf16.mxu0 0
    %392 = vmatpush1.bf16.msra.mxu0 %v368
    %393 = vmatprep.subr.bf16.mxu0 0
    %394 = vmatpush1.bf16.msra.mxu0 0
    %395 = vmatprep.subr.bf16.mxu0 0
    %396 = vmatpush1.bf16.msra.mxu0 0
    %397 = vmatprep.subr.bf16.mxu0 0
    %398 = vmatpush1.bf16.msra.mxu0 0
    %399 = vmatprep.subr.bf16.mxu0 0
    %400 = vmatpush1.bf16.msra.mxu0 0
    %401 = vmatprep.subr.bf16.mxu0 0
    %402 = vmatpush1.bf16.msra.mxu0 0
    %403 = vmatprep.subr.bf16.mxu0 0
    %404 = vmatpush1.bf16.msra.mxu0 0
    %405 = vmatprep.subr.bf16.mxu0 0
    %406 = vmatpush1.bf16.msra.mxu0 0
    %407 = vmatprep.subr.bf16.mxu0 0
    %408 = vmatpush1.bf16.msra.mxu0 0
    %409 = vmatprep.mubr.bf16.mxu0 0
    %410 = vmatmul.mubr.bf16.gmra.mrb[0].mxu0 %v304
    %v411 = vpop.f32.mrb[0].mxu0
    %v412 = vadd.f32 %v327, %v411
    %v413 = vpop.f32.mrb[0].mxu0
    %v414 = vpop.f32.mrb[0].mxu0
    %v415 = vadd.f32 %v327, %v414
    %v416 = vpop.f32.mrb[0].mxu0
    %417 = vmatprep.mubr.bf16.mxu0 0
    %418 = vmatmul.mubr.bf16.gmra.mrb[0].mxu0 %v305
    %v419 = vpop.f32.mrb[0].mxu0
    %v420 = vadd.f32 %v327, %v419
    %v421 = vpop.f32.mrb[0].mxu0
    %v422 = vpop.f32.mrb[0].mxu0
    %v423 = vadd.f32 %v327, %v422
    %v424 = vpop.f32.mrb[0].mxu0
    %425 = vdwg.mxu0
    %v426 = vld [vmem:[%s1] sm:$0xff]
    %v427 = vld [vmem:[%s1 + $0x8] sm:$0xff]
    %v428 = vld [vmem:[%s1 + $0x10] sm:$0xff]
    %v429 = vld [vmem:[%s1 + $0x18] sm:$0xff]
    %431 = vset.pattern.permute.xlu0 0
    %432 = vperm.xlu0 %431, %v426
    %v433 = vpop.permute.xlu0 %432
    %436 = vset.pattern.permute.xlu0 0
    %437 = vperm.xlu0 %436, %v427
    %v438 = vpop.permute.xlu0 %437
    %441 = vset.pattern.permute.xlu0 0
    %442 = vperm.xlu0 %441, %v428
    %v443 = vpop.permute.xlu0 %442
    %446 = vset.pattern.permute.xlu0 0
    %447 = vperm.xlu0 %446, %v429
    %v448 = vpop.permute.xlu0 %447
    %v450 = vmul.f32 %v412, %v433
    %v451 = vmul.f32 %v415, %v438
    %v452 = vmul.f32 %v420, %v443
    %v453 = vmul.f32 %v423, %v448
    %454 = vst [vmem:[#allocation5] sm:$0xff] %v450
    %455 = vst [vmem:[#allocation5 + $0x8] sm:$0xff] %v451
    %456 = vst [vmem:[#allocation5 + $0x10] sm:$0xff] %v452
    %457 = vst [vmem:[#allocation5 + $0x18] sm:$0xff] %v453
    // Predicated region
    $region34: #{tpu_custom_call.1} parent=1 // pred_check
      _
    $region35: #{tpu_custom_call.1} parent=1 // pred_check_branch
      %459 = sbr.rel (0) target = $region37
    $region36: #{tpu_custom_call.1} parent=1 // pred_region
      %s461 = ssub.s32 512, 512
      %462 = vsyncadd [#allocation4], %s461
      %s463 = sshll.u32 [#allocation5], 4
      %s464 = int_to_ptr.vmem [resolvable:$true] %s463
      %469 = dma.vmem_to_hbm [thread:$0]  %s464, 512, %s7, [#allocation4], 128, 128, 8
    $region37: #{tpu_custom_call.1} parent=1 // pred_fallthru
      _
    // Predicated region
    $region38: #{tpu_custom_call.1} parent=1 // pred_check
      _
    $region39: #{tpu_custom_call.1} parent=1 // pred_check_branch
      %471 = sbr.rel (0) target = $region41
    $region40: #{tpu_custom_call.1} parent=1 // pred_region
      %472 = dma.done [#allocation4], 512
    $region41: #{tpu_custom_call.1} parent=1 // pred_fallthru
      _
    %473 = vsyncpa [#allocation3], 1
    %474 = vsyncpa [#allocation4], 1

</llo_original>
